<compile_context>
chip_gen: v6e
topology: v6e:2x2x1
jax: 0.10.0
libtpu: 0.0.40
codegen_flags: <defaults>
</compile_context>

<pallas_src>
import jax
import jax.numpy as jnp
from jax.experimental import pallas as pl
from jax.experimental.pallas import tpu as pltpu


def _round_up(n, m):
    return ((n + m - 1) // m) * m


def _pad2d(a, rows, cols):
    return jnp.pad(a, ((0, rows - a.shape[0]), (0, cols - a.shape[1])))


def _make_dqn_kernel(bf16_activations):
    """Kernel body; bf16_activations selects ReLU on bf16 (v6e/v7x) vs f32 (v5e)."""

    def kernel(x_ref, w1_ref, b1_ref, w2_ref, b2_ref, w3_ref, b3_ref, o_ref):
        # x_ref: (tb, in_size) f32 -> cast to bf16 in-kernel (MXU operand).
        x = x_ref[...].astype(jnp.bfloat16)

        # layer 1: Linear + ReLU (bf16 MXU operands, f32 accumulate / bias add)
        h = jnp.dot(x, w1_ref[...], preferred_element_type=jnp.float32) + b1_ref[...]
        if bf16_activations:
            h = jnp.maximum(h.astype(jnp.bfloat16), 0.0)
        else:
            h = jnp.maximum(h, 0.0).astype(jnp.bfloat16)

        # layer 2: Linear + ReLU
        h = jnp.dot(h, w2_ref[...], preferred_element_type=jnp.float32) + b2_ref[...]
        if bf16_activations:
            h = jnp.maximum(h.astype(jnp.bfloat16), 0.0)
        else:
            h = jnp.maximum(h, 0.0).astype(jnp.bfloat16)

        # layer 3: Linear (Q-values); bf16 store halves the HBM writeback.
        q = jnp.dot(h, w3_ref[...], preferred_element_type=jnp.float32) + b3_ref[...]
        o_ref[...] = q.astype(o_ref.dtype)

    return kernel


def prepare_dqn_params(w1, b1, w2, b2, w3, b3):
    """One-time preprocessing of PyTorch-layout weights (hoisted out of the call path).

    w*: (out_features, in_features); b*: (1, out_features).
    Returns a dict of transposed / lane-padded / bf16 weights + f32 biases.
    Padded hidden/output columns are exactly zero through all three layers.
    """
    hid1, in_size = w1.shape
    hid2, hid1_b = w2.shape
    out_size, hid2_b = w3.shape
    assert hid1_b == hid1 and hid2_b == hid2, "linear2/linear3 in_features mismatch"

    hid1_p = _round_up(hid1, 128)
    hid2_p = _round_up(hid2, 128)
    out_p = _round_up(out_size, 128)

    return dict(
        # pre-transposed to (in, out): no in-kernel transposes. K of w1 stays
        # un-padded (= in_size); Mosaic pads K into the MXU internally.
        w1=_pad2d(w1.T, in_size, hid1_p).astype(jnp.bfloat16),
        b1=_pad2d(b1, 1, hid1_p).astype(jnp.float32),
        w2=_pad2d(w2.T, hid1_p, hid2_p).astype(jnp.bfloat16),
        b2=_pad2d(b2, 1, hid2_p).astype(jnp.float32),
        w3=_pad2d(w3.T, hid2_p, out_p).astype(jnp.bfloat16),
        b3=_pad2d(b3, 1, out_p).astype(jnp.float32),
        in_size=in_size,
        out_size=out_size,
    )


def _choose_tile_b(batch, tile_b_cap):
    """Batch tile: multiple of 16 (bf16 sublane packing), capped, and split so that
    batches with enough rows give >= 2 grid steps (both v7x TensorCores) while
    avoiding pathological padding when B barely exceeds a single tile."""
    b16 = _round_up(max(batch, 1), 16)
    tb = min(_round_up(tile_b_cap, 16), b16)
    if b16 > 16:
        half = ((b16 // 16 + 1) // 2) * 16  # ceil(b16/2) rounded up to 16
        tb = min(tb, half)
    return max(tb, 16)


def _default_bf16_activations():
    try:
        kind = jax.devices()[0].device_kind.lower()
    except Exception:
        return True
    # v5e has no bf16 VPU path -> keep the ReLU / bias epilogue in f32 there.
    return "v5" not in kind


def _pinned_spec(shape):
    """Weight/bias block: constant index_map, single-buffered (never changes)."""
    idx = lambda i: (0, 0)
    try:
        return pl.BlockSpec(shape, idx, pipeline_mode=pl.Buffered(1))
    except TypeError:  # older BlockSpec without pipeline_mode
        return pl.BlockSpec(shape, idx)


def dqn_forward(x, params, *, tile_b_cap=512, bf16_activations=None):
    """Pallas forward for DeepQNetwork.

    x: (B, input_size) f32; params: dict from prepare_dqn_params().
    Returns (B, output_size) f32.
    """
    if bf16_activations is None:
        bf16_activations = _default_bf16_activations()

    B, in_size = x.shape
    assert in_size == params["in_size"], "x feature dim mismatch"
    out_size = params["out_size"]
    hid1_p = params["w1"].shape[1]
    hid2_p = params["w2"].shape[1]
    out_p = params["w3"].shape[1]

    tb = _choose_tile_b(B, tile_b_cap)
    n_tiles = pl.cdiv(B, tb)
    b_p = n_tiles * tb
    xp = x if b_p == B else jnp.pad(x, ((0, b_p - B), (0, 0)))

    # Derived VMEM budget per core: double-buffered x / out tiles, single-buffered
    # pinned weights & biases, live f32/bf16 intermediates -- plus headroom.
    vmem_need = (
        2 * tb * in_size * 4                                        # x (f32, 2 bufs)
        + 2 * tb * out_p * 2                                        # out (bf16, 2 bufs)
        + (in_size * hid1_p + hid1_p * hid2_p + hid2_p * out_p) * 2  # bf16 weights, 1 buf
        + (hid1_p + hid2_p + out_p) * 4                             # f32 biases
        + 2 * tb * max(hid1_p, hid2_p) * 4                          # intermediates
    )
    vmem_limit = int(min(max(2 * vmem_need + (8 << 20), 32 << 20), 96 << 20))

    out_padded = pl.pallas_call(
        _make_dqn_kernel(bf16_activations),
        out_shape=jax.ShapeDtypeStruct((b_p, out_p), jnp.bfloat16),
        grid=(n_tiles,),
        in_specs=[
            pl.BlockSpec((tb, in_size), lambda i: (i, 0)),  # raw f32 x tile, pipelined
            _pinned_spec((in_size, hid1_p)),                # w1 (bf16), VMEM-resident
            _pinned_spec((1, hid1_p)),                      # b1 (f32)
            _pinned_spec((hid1_p, hid2_p)),                 # w2
            _pinned_spec((1, hid2_p)),                      # b2
            _pinned_spec((hid2_p, out_p)),                  # w3
            _pinned_spec((1, out_p)),                       # b3
        ],
        out_specs=pl.BlockSpec((tb, out_p), lambda i: (i, 0)),
        compiler_params=pltpu.CompilerParams(
            dimension_semantics=("parallel",),
            vmem_limit_bytes=vmem_limit,
        ),
    )(xp, params["w1"], params["b1"], params["w2"], params["b2"],
      params["w3"], params["b3"])

    # Slice away batch / lane padding; upcast after the slice to keep the module's
    # f32 output contract.
    return out_padded[:B, :out_size].astype(jnp.float32)


def init_dqn_params(key, input_size, hidden_size, output_size):
    """Deterministic init mimicking PyTorch nn.Linear default U(-1/sqrt(fan_in), .)."""
    keys = jax.random.split(key, 6)

    def linear_init(kw, kb, fan_in, fan_out):
        bound = 1.0 / jnp.sqrt(fan_in)
        w = jax.random.uniform(kw, (fan_out, fan_in), jnp.float32, -bound, bound)
        b = jax.random.uniform(kb, (1, fan_out), jnp.float32, -bound, bound)
        return w, b

    w1, b1 = linear_init(keys[0], keys[1], input_size, hidden_size)
    w2, b2 = linear_init(keys[2], keys[3], hidden_size, hidden_size)
    w3, b3 = linear_init(keys[4], keys[5], hidden_size, output_size)
    return w1, b1, w2, b2, w3, b3


def reference_forward_f32(x, w1, b1, w2, b2, w3, b3):
    h1 = jnp.maximum(x @ w1.T + b1, 0.0)
    h2 = jnp.maximum(h1 @ w2.T + b2, 0.0)
    return h2 @ w3.T + b3


def reference_forward_bf16(x, w1, b1, w2, b2, w3, b3):
    # Mirrors the kernel's precision choices: bf16 dot operands, f32 accumulation,
    # bf16 output store.
    bf = jnp.bfloat16
    h1 = jnp.maximum(
        jnp.dot(x.astype(bf), w1.astype(bf).T, preferred_element_type=jnp.float32) + b1, 0.0)
    h2 = jnp.maximum(
        jnp.dot(h1.astype(bf), w2.astype(bf).T, preferred_element_type=jnp.float32) + b2, 0.0)
    q = jnp.dot(h2.astype(bf), w3.astype(bf).T, preferred_element_type=jnp.float32) + b3
    return q.astype(bf).astype(jnp.float32)


if __name__ == "__main__":
    input_size, hidden_size, output_size = 16, 32, 4
    batch = 8

    key = jax.random.PRNGKey(0)
    kx, kp = jax.random.split(key)
    x = jax.random.normal(kx, (batch, input_size), jnp.float32)
    raw_params = init_dqn_params(kp, input_size, hidden_size, output_size)

    prepared = prepare_dqn_params(*raw_params)   # one-time weight prep (hoisted)

    out = dqn_forward(x, prepared)
    out = jax.block_until_ready(out)
    assert out.shape == (batch, output_size)
    assert out.dtype == jnp.float32

    # Tight match vs. the bf16-operand / bf16-store reference ...
    ref_bf16 = reference_forward_bf16(x, *raw_params)
    assert jnp.allclose(out, ref_bf16, atol=1e-2, rtol=1e-2), \
        "Pallas output mismatch vs bf16-operand reference"
    # ... and within bf16 precision of the full-f32 PyTorch-equivalent reference.
    ref_f32 = reference_forward_f32(x, *raw_params)
    assert jnp.allclose(out, ref_f32, atol=5e-2, rtol=5e-2), \
        "Pallas output mismatch vs f32 reference"

    print("KERNEL_OK")
</pallas_src>

<mosaic_0001>
module attributes {stable_mosaic.version = 11 : i64} {
  func.func @kernel(%arg0: i32, %arg1: memref<16x16xf32, #tpu.memory_space<vmem>>, %arg2: memref<16x128xbf16, #tpu.memory_space<vmem>>, %arg3: memref<1x128xf32, #tpu.memory_space<vmem>>, %arg4: memref<128x128xbf16, #tpu.memory_space<vmem>>, %arg5: memref<1x128xf32, #tpu.memory_space<vmem>>, %arg6: memref<128x128xbf16, #tpu.memory_space<vmem>>, %arg7: memref<1x128xf32, #tpu.memory_space<vmem>>, %arg8: memref<16x128xbf16, #tpu.memory_space<vmem>>) attributes {dimension_semantics = [#tpu.dimension_semantics<parallel>], iteration_bounds = array<i64: 1>, scalar_prefetch = 0 : i64, scratch_operands = 0 : i64, tpu.core_type = #tpu.core_type<tc>, window_params = [{transform_indices = @transform_0, window_bounds = array<i64: 16, 16>}, {pipeline_mode = #tpu.pipeline_mode<synchronous>, transform_indices = @transform_1, window_bounds = array<i64: 16, 128>}, {pipeline_mode = #tpu.pipeline_mode<synchronous>, transform_indices = @transform_2, window_bounds = array<i64: 1, 128>}, {pipeline_mode = #tpu.pipeline_mode<synchronous>, transform_indices = @transform_3, window_bounds = array<i64: 128, 128>}, {pipeline_mode = #tpu.pipeline_mode<synchronous>, transform_indices = @transform_4, window_bounds = array<i64: 1, 128>}, {pipeline_mode = #tpu.pipeline_mode<synchronous>, transform_indices = @transform_5, window_bounds = array<i64: 128, 128>}, {pipeline_mode = #tpu.pipeline_mode<synchronous>, transform_indices = @transform_6, window_bounds = array<i64: 1, 128>}, {transform_indices = @transform_7, window_bounds = array<i64: 16, 128>}]} {
    %c0 = arith.constant 0 : index
    %c0_0 = arith.constant 0 : index
    %0 = vector.load %arg1[%c0, %c0_0] : memref<16x16xf32, #tpu.memory_space<vmem>>, vector<16x16xf32>
    %1 = arith.truncf %0 : vector<16x16xf32> to vector<16x16xbf16>
    %c0_1 = arith.constant 0 : index
    %c0_2 = arith.constant 0 : index
    %2 = vector.load %arg2[%c0_1, %c0_2] : memref<16x128xbf16, #tpu.memory_space<vmem>>, vector<16x128xbf16>
    %cst = arith.constant dense<0.000000e+00> : vector<16x128xf32>
    %3 = tpu.matmul %1, %2, %cst {dimension_numbers = #tpu.dot_dimension_numbers<[1], [0], [0], [1], [0, 0, 1, 1], [], []>} : vector<16x16xbf16>, vector<16x128xbf16>, vector<16x128xf32> -> vector<16x128xf32>
    %c0_3 = arith.constant 0 : index
    %c0_4 = arith.constant 0 : index
    %4 = vector.load %arg3[%c0_3, %c0_4] : memref<1x128xf32, #tpu.memory_space<vmem>>, vector<1x128xf32>
    %5 = vector.broadcast %4 : vector<1x128xf32> to vector<16x128xf32>
    %6 = arith.addf %3, %5 : vector<16x128xf32>
    %7 = arith.truncf %6 : vector<16x128xf32> to vector<16x128xbf16>
    %cst_5 = arith.constant 0.000000e+00 : bf16
    %8 = vector.broadcast %cst_5 : bf16 to vector<16x128xbf16>
    %9 = arith.maximumf %7, %8 : vector<16x128xbf16>
    %c0_6 = arith.constant 0 : index
    %c0_7 = arith.constant 0 : index
    %10 = vector.load %arg4[%c0_6, %c0_7] : memref<128x128xbf16, #tpu.memory_space<vmem>>, vector<128x128xbf16>
    %cst_8 = arith.constant dense<0.000000e+00> : vector<16x128xf32>
    %11 = tpu.matmul %9, %10, %cst_8 {dimension_numbers = #tpu.dot_dimension_numbers<[1], [0], [0], [1], [0, 0, 1, 1], [], []>} : vector<16x128xbf16>, vector<128x128xbf16>, vector<16x128xf32> -> vector<16x128xf32>
    %c0_9 = arith.constant 0 : index
    %c0_10 = arith.constant 0 : index
    %12 = vector.load %arg5[%c0_9, %c0_10] : memref<1x128xf32, #tpu.memory_space<vmem>>, vector<1x128xf32>
    %13 = vector.broadcast %12 : vector<1x128xf32> to vector<16x128xf32>
    %14 = arith.addf %11, %13 : vector<16x128xf32>
    %15 = arith.truncf %14 : vector<16x128xf32> to vector<16x128xbf16>
    %cst_11 = arith.constant 0.000000e+00 : bf16
    %16 = vector.broadcast %cst_11 : bf16 to vector<16x128xbf16>
    %17 = arith.maximumf %15, %16 : vector<16x128xbf16>
    %c0_12 = arith.constant 0 : index
    %c0_13 = arith.constant 0 : index
    %18 = vector.load %arg6[%c0_12, %c0_13] : memref<128x128xbf16, #tpu.memory_space<vmem>>, vector<128x128xbf16>
    %cst_14 = arith.constant dense<0.000000e+00> : vector<16x128xf32>
    %19 = tpu.matmul %17, %18, %cst_14 {dimension_numbers = #tpu.dot_dimension_numbers<[1], [0], [0], [1], [0, 0, 1, 1], [], []>} : vector<16x128xbf16>, vector<128x128xbf16>, vector<16x128xf32> -> vector<16x128xf32>
    %c0_15 = arith.constant 0 : index
    %c0_16 = arith.constant 0 : index
    %20 = vector.load %arg7[%c0_15, %c0_16] : memref<1x128xf32, #tpu.memory_space<vmem>>, vector<1x128xf32>
    %21 = vector.broadcast %20 : vector<1x128xf32> to vector<16x128xf32>
    %22 = arith.addf %19, %21 : vector<16x128xf32>
    %23 = arith.truncf %22 : vector<16x128xf32> to vector<16x128xbf16>
    %c0_17 = arith.constant 0 : index
    %c0_18 = arith.constant 0 : index
    %24 = vector.load %arg8[%c0_17, %c0_18] : memref<16x128xbf16, #tpu.memory_space<vmem>>, vector<16x128xbf16>
    tpu.vector_store %arg8[%c0_17, %c0_18], %23 {strides = array<i32>} : memref<16x128xbf16, #tpu.memory_space<vmem>>, vector<16x128xbf16>,
    return
  }
  func.func @transform_0(%arg0: i32) -> (i32, i32) {
    %c0_i32 = arith.constant 0 : i32
    %c0_i32_0 = arith.constant 0 : i32
    return %arg0, %c0_i32 : i32, i32
  }
  func.func @transform_1(%arg0: i32) -> (i32, i32) {
    %c0_i32 = arith.constant 0 : i32
    %c0_i32_0 = arith.constant 0 : i32
    %c0_i32_1 = arith.constant 0 : i32
    return %c0_i32, %c0_i32_0 : i32, i32
  }
  func.func @transform_2(%arg0: i32) -> (i32, i32) {
    %c0_i32 = arith.constant 0 : i32
    %c0_i32_0 = arith.constant 0 : i32
    %c0_i32_1 = arith.constant 0 : i32
    return %c0_i32, %c0_i32_0 : i32, i32
  }
  func.func @transform_3(%arg0: i32) -> (i32, i32) {
    %c0_i32 = arith.constant 0 : i32
    %c0_i32_0 = arith.constant 0 : i32
    %c0_i32_1 = arith.constant 0 : i32
    return %c0_i32, %c0_i32_0 : i32, i32
  }
  func.func @transform_4(%arg0: i32) -> (i32, i32) {
    %c0_i32 = arith.constant 0 : i32
    %c0_i32_0 = arith.constant 0 : i32
    %c0_i32_1 = arith.constant 0 : i32
    return %c0_i32, %c0_i32_0 : i32, i32
  }
  func.func @transform_5(%arg0: i32) -> (i32, i32) {
    %c0_i32 = arith.constant 0 : i32
    %c0_i32_0 = arith.constant 0 : i32
    %c0_i32_1 = arith.constant 0 : i32
    return %c0_i32, %c0_i32_0 : i32, i32
  }
  func.func @transform_6(%arg0: i32) -> (i32, i32) {
    %c0_i32 = arith.constant 0 : i32
    %c0_i32_0 = arith.constant 0 : i32
    %c0_i32_1 = arith.constant 0 : i32
    return %c0_i32, %c0_i32_0 : i32, i32
  }
  func.func @transform_7(%arg0: i32) -> (i32, i32) {
    %c0_i32 = arith.constant 0 : i32
    %c0_i32_0 = arith.constant 0 : i32
    return %arg0, %c0_i32 : i32, i32
  }
}

</mosaic_0001>

<llo_original>
// kernel: tpu_custom_call.1
$region0: #{tpu_custom_call.1}
  #allocation0 [shape = 'u32[]', space=smem, size = 0x4, offset = 0x4, fixed_abs, tag = 'smem constant byte address 0x4 - core index']
  #allocation1 [shape = 'u32[144,128]{1,0:T(1,128)}', space=vmem, size = 0x12000, scoped, tag = 'internal scratch']
  %s0 = inlined_call_operand.hbm [shape: f32[16,16], index: 0, kind: input, shape index: {}]
  %s1 = inlined_call_operand.hbm [shape: bf16[16,128], index: 1, kind: input, shape index: {}]
  %s2 = inlined_call_operand.vmem [shape: f32[1,128], index: 2, kind: input, shape index: {}]
  %s3 = inlined_call_operand.hbm [shape: bf16[128,128], index: 3, kind: input, shape index: {}]
  %s4 = inlined_call_operand.vmem [shape: f32[1,128], index: 4, kind: input, shape index: {}]
  %s5 = inlined_call_operand.hbm [shape: bf16[128,128], index: 5, kind: input, shape index: {}]
  %s6 = inlined_call_operand.vmem [shape: f32[1,128], index: 6, kind: input, shape index: {}]
  %s7 = inlined_call_operand.hbm [shape: bf16[16,128], index: 7, kind: output, shape index: {}]
  %s8 = sld [smem:[#allocation0]]
  $region54: #{tpu_custom_call.1} parent=0
    _
  %s10 = ssub.s32 1, %s8
  %s11 = scalar_select 0, %s10, %s8
  $region1: #{tpu_custom_call.1} parent=0
    #allocation2 [shape = 'u8[8192]{0}', space=vmem, size = 0x2000, scoped, tag = 'input window, operand 0, single buffered']
    #allocation3 [shape = 's32[1]{0}', space=sflag, size = 0x4, scoped, tag = 'scoped memory for tpu_custom_call.1']
    #allocation4 [shape = 's32[1]{0}', space=sflag, size = 0x4, scoped, tag = 'scoped memory for tpu_custom_call.1']
    #allocation5 [shape = 'u8[4096]{0}', space=vmem, size = 0x1000, scoped, tag = 'input window, operand 1, single buffered']
    #allocation6 [shape = 's32[1]{0}', space=sflag, size = 0x4, scoped, tag = 'scoped memory for tpu_custom_call.1']
    #allocation7 [shape = 'u8[32768]{0}', space=vmem, size = 0x8000, scoped, tag = 'input window, operand 3, single buffered']
    #allocation8 [shape = 'u8[32768]{0}', space=vmem, size = 0x8000, scoped, tag = 'input window, operand 5, single buffered']
    #allocation9 [shape = 's32[1]{0}', space=sflag, size = 0x4, scoped, tag = 'scoped memory for tpu_custom_call.1']
    #allocation10 [shape = 'u8[4096]{0}', space=vmem, size = 0x1000, scoped, tag = 'output window, operand 0, single buffered']
    %12 = vsyncpa [#allocation3], 0
    %13 = vsyncpa [#allocation6], 0
    %14 = vsyncpa [#allocation9], 0
    %15 = vsyncpa [#allocation4], 0
    // Predicated region
    $region2: #{tpu_custom_call.1} parent=1 // pred_check
      _
    $region3: #{tpu_custom_call.1} parent=1 // pred_check_branch
      %17 = sbr.rel (0) target = $region5
    $region4: #{tpu_custom_call.1} parent=1 // pred_region
      %s19 = ssub.s32 256, 256
      %20 = vsyncadd [#allocation3], %s19
      %s21 = sshll.u32 [#allocation2], 4
      %s22 = int_to_ptr.vmem [resolvable:$true] %s21
      %27 = dma.hbm_to_vmem [thread:$0]  %s0, 256, %s22, [#allocation3], 128, 128, 8
    $region5: #{tpu_custom_call.1} parent=1 // pred_fallthru
      _
    // Predicated region
    $region6: #{tpu_custom_call.1} parent=1 // pred_check
      _
    $region7: #{tpu_custom_call.1} parent=1 // pred_check_branch
      %29 = sbr.rel (0) target = $region9
    $region8: #{tpu_custom_call.1} parent=1 // pred_region
      %s31 = ssub.s32 128, 128
      %32 = vsyncadd [#allocation6], %s31
      %s33 = sshll.u32 [#allocation5], 4
      %s34 = int_to_ptr.vmem [resolvable:$true] %s33
      %39 = dma.hbm_to_vmem [thread:$0]  %s1, 128, %s34, [#allocation6], 64, 64, 4
    $region9: #{tpu_custom_call.1} parent=1 // pred_fallthru
      _
    // Predicated region
    $region10: #{tpu_custom_call.1} parent=1 // pred_check
      _
    $region11: #{tpu_custom_call.1} parent=1 // pred_check_branch
      %41 = sbr.rel (0) target = $region13
    $region12: #{tpu_custom_call.1} parent=1 // pred_region
      _
    $region13: #{tpu_custom_call.1} parent=1 // pred_fallthru
      _
    // Predicated region
    $region14: #{tpu_custom_call.1} parent=1 // pred_check
      _
    $region15: #{tpu_custom_call.1} parent=1 // pred_check_branch
      %43 = sbr.rel (0) target = $region17
    $region16: #{tpu_custom_call.1} parent=1 // pred_region
      %s45 = ssub.s32 1024, 1024
      %46 = vsyncadd [#allocation6], %s45
      %s47 = sshll.u32 [#allocation7], 4
      %s48 = int_to_ptr.vmem [resolvable:$true] %s47
      %53 = dma.hbm_to_vmem [thread:$0]  %s3, 1024, %s48, [#allocation6], 64, 64, 4
    $region17: #{tpu_custom_call.1} parent=1 // pred_fallthru
      _
    // Predicated region
    $region18: #{tpu_custom_call.1} parent=1 // pred_check
      _
    $region19: #{tpu_custom_call.1} parent=1 // pred_check_branch
      %55 = sbr.rel (0) target = $region21
    $region20: #{tpu_custom_call.1} parent=1 // pred_region
      _
    $region21: #{tpu_custom_call.1} parent=1 // pred_fallthru
      _
    // Predicated region
    $region22: #{tpu_custom_call.1} parent=1 // pred_check
      _
    $region23: #{tpu_custom_call.1} parent=1 // pred_check_branch
      %57 = sbr.rel (0) target = $region25
    $region24: #{tpu_custom_call.1} parent=1 // pred_region
      %s59 = ssub.s32 1024, 1024
      %60 = vsyncadd [#allocation9], %s59
      %s61 = sshll.u32 [#allocation8], 4
      %s62 = int_to_ptr.vmem [resolvable:$true] %s61
      %67 = dma.hbm_to_vmem [thread:$0]  %s5, 1024, %s62, [#allocation9], 64, 64, 4
    $region25: #{tpu_custom_call.1} parent=1 // pred_fallthru
      _
    // Predicated region
    $region26: #{tpu_custom_call.1} parent=1 // pred_check
      _
    $region27: #{tpu_custom_call.1} parent=1 // pred_check_branch
      %69 = sbr.rel (0) target = $region29
    $region28: #{tpu_custom_call.1} parent=1 // pred_region
      _
    $region29: #{tpu_custom_call.1} parent=1 // pred_fallthru
      _
    // Predicated region
    $region30: #{tpu_custom_call.1} parent=1 // pred_check
      _
    $region31: #{tpu_custom_call.1} parent=1 // pred_check_branch
      %71 = sbr.rel (0) target = $region33
    $region32: #{tpu_custom_call.1} parent=1 // pred_region
      %72 = dma.done [#allocation3], 256
    $region33: #{tpu_custom_call.1} parent=1 // pred_fallthru
      _
    // Predicated region
    $region34: #{tpu_custom_call.1} parent=1 // pred_check
      _
    $region35: #{tpu_custom_call.1} parent=1 // pred_check_branch
      %74 = sbr.rel (0) target = $region37
    $region36: #{tpu_custom_call.1} parent=1 // pred_region
      %75 = dma.done [#allocation6], 128
    $region37: #{tpu_custom_call.1} parent=1 // pred_fallthru
      _
    // Predicated region
    $region38: #{tpu_custom_call.1} parent=1 // pred_check
      _
    $region39: #{tpu_custom_call.1} parent=1 // pred_check_branch
      %77 = sbr.rel (0) target = $region41
    $region40: #{tpu_custom_call.1} parent=1 // pred_region
      %78 = dma.done [#allocation6], 1024
    $region41: #{tpu_custom_call.1} parent=1 // pred_fallthru
      _
    // Predicated region
    $region42: #{tpu_custom_call.1} parent=1 // pred_check
      _
    $region43: #{tpu_custom_call.1} parent=1 // pred_check_branch
      %80 = sbr.rel (0) target = $region45
    $region44: #{tpu_custom_call.1} parent=1 // pred_region
      %81 = dma.done [#allocation9], 1024
    $region45: #{tpu_custom_call.1} parent=1 // pred_fallthru
      _
    %v83 = vld [vmem:[#allocation2] sm:$0xff]
    %v84 = vld [vmem:[#allocation2 + $0x8] sm:$0xff]
    %v85 = vpack.c.bf16 %v84, %v83
    %v86 = vld [vmem:[#allocation5] sm:$0xf]
    %v87 = vld [vmem:[#allocation5 + $0x4] sm:$0xf]
    %v88 = vld [vmem:[%s2] sm:$0x1]
    %v90 = vlaneseq
    %v91 = vshrl.u32 %v90, 7
    %v92 = vsub.s32 0, %v91
    %v93 = vrot.slane %v88, %v92
    %v97 = vunpack.c.l.b16 %v86
    %v98 = vunpack.c.l.b16 %v87
    %v99 = vpack.c.b16 %v98, %v97
    %vm101 = vcmask 130048
    %v103 = vsel %vm101, %v85, 0
    %105 = vmatprep.subr.bf16.mxu0 0
    %106 = vmatpush1.bf16.msra.mxu0 0
    %107 = vmatprep.subr.bf16.mxu0 0
    %108 = vmatpush1.bf16.msra.mxu0 0
    %109 = vmatprep.subr.bf16.mxu0 0
    %110 = vmatpush1.bf16.msra.mxu0 0
    %111 = vmatprep.subr.bf16.mxu0 0
    %112 = vmatpush1.bf16.msra.mxu0 0
    %113 = vmatprep.subr.bf16.mxu0 0
    %114 = vmatpush1.bf16.msra.mxu0 0
    %115 = vmatprep.subr.bf16.mxu0 0
    %116 = vmatpush1.bf16.msra.mxu0 0
    %117 = vmatprep.subr.bf16.mxu0 0
    %118 = vmatpush1.bf16.msra.mxu0 0
    %119 = vmatprep.subr.bf16.mxu0 0
    %120 = vmatpush1.bf16.msra.mxu0 %v99
    %121 = vmatprep.subr.bf16.mxu0 0
    %122 = vmatpush2.bf16.msra.mxu0 0
    %123 = vmatprep.subr.bf16.mxu0 0
    %124 = vmatpush2.bf16.msra.mxu0 0
    %125 = vmatprep.subr.bf16.mxu0 0
    %126 = vmatpush2.bf16.msra.mxu0 0
    %127 = vmatprep.subr.bf16.mxu0 0
    %128 = vmatpush2.bf16.msra.mxu0 0
    %129 = vmatprep.subr.bf16.mxu0 0
    %130 = vmatpush2.bf16.msra.mxu0 0
    %131 = vmatprep.subr.bf16.mxu0 0
    %132 = vmatpush2.bf16.msra.mxu0 0
    %133 = vmatprep.subr.bf16.mxu0 0
    %134 = vmatpush2.bf16.msra.mxu0 0
    %135 = vmatprep.subr.bf16.mxu0 0
    %136 = vmatpush2.bf16.msra.mxu0 0
    %137 = vmatprep.mubr.bf16.mxu0 0
    %138 = vmatmul.mubr.bf16.gmra.mxu0 %v103
    %v139 = vpop.f32.mrf.mxu0
    %v140 = vadd.f32 %v93, %v139
    %v141 = vpop.f32.mrf.mxu0
    %v142 = vpop.f32.mrf.mxu0
    %v143 = vadd.f32 %v93, %v142
    %v144 = vpop.f32.mrf.mxu0
    %145 = vdwg.mxu0
    %v146 = vpack.c.bf16 %v143, %v140
    %v147 = vmax.bf16 %v146, 0
    %v148 = vld [vmem:[#allocation7] sm:$0xf]
    %v149 = vld [vmem:[#allocation7 + $0x4] sm:$0xf]
    %v150 = vld [vmem:[#allocation7 + $0x8] sm:$0xf]
    %v151 = vld [vmem:[#allocation7 + $0xc] sm:$0xf]
    %v152 = vld [vmem:[#allocation7 + $0x10] sm:$0xf]
    %v153 = vld [vmem:[#allocation7 + $0x14] sm:$0xf]
    %v154 = vld [vmem:[#allocation7 + $0x18] sm:$0xf]
    %v155 = vld [vmem:[#allocation7 + $0x1c] sm:$0xf]
    %v156 = vld [vmem:[#allocation7 + $0x20] sm:$0xf]
    %v157 = vld [vmem:[#allocation7 + $0x24] sm:$0xf]
    %v158 = vld [vmem:[#allocation7 + $0x28] sm:$0xf]
    %v159 = vld [vmem:[#allocation7 + $0x2c] sm:$0xf]
    %v160 = vld [vmem:[#allocation7 + $0x30] sm:$0xf]
    %v161 = vld [vmem:[#allocation7 + $0x34] sm:$0xf]
    %v162 = vld [vmem:[#allocation7 + $0x38] sm:$0xf]
    %v163 = vld [vmem:[#allocation7 + $0x3c] sm:$0xf]
    %v164 = vld [vmem:[%s4] sm:$0x1]
    %v166 = vlaneseq
    %v167 = vshrl.u32 %v166, 7
    %v168 = vsub.s32 0, %v167
    %v169 = vrot.slane %v164, %v168
    %v187 = vunpack.c.l.b16 %v148
    %v188 = vunpack.c.l.b16 %v149
    %v189 = vunpack.c.l.b16 %v150
    %v190 = vunpack.c.l.b16 %v151
    %v191 = vunpack.c.l.b16 %v152
    %v192 = vunpack.c.l.b16 %v153
    %v193 = vunpack.c.l.b16 %v154
    %v194 = vunpack.c.l.b16 %v155
    %v195 = vunpack.c.l.b16 %v156
    %v196 = vunpack.c.l.b16 %v157
    %v197 = vunpack.c.l.b16 %v158
    %v198 = vunpack.c.l.b16 %v159
    %v199 = vunpack.c.l.b16 %v160
    %v200 = vunpack.c.l.b16 %v161
    %v201 = vunpack.c.l.b16 %v162
    %v202 = vunpack.c.l.b16 %v163
    %v203 = vpack.c.b16 %v188, %v187
    %v204 = vpack.c.b16 %v190, %v189
    %v205 = vpack.c.b16 %v192, %v191
    %v206 = vpack.c.b16 %v194, %v193
    %v207 = vpack.c.b16 %v196, %v195
    %v208 = vpack.c.b16 %v198, %v197
    %v209 = vpack.c.b16 %v200, %v199
    %v210 = vpack.c.b16 %v202, %v201
    %219 = vmatprep.subr.bf16.mxu0 0
    %220 = vmatpush1.bf16.msra.mxu0 %v210
    %221 = vmatprep.subr.bf16.mxu0 0
    %222 = vmatpush1.bf16.msra.mxu0 %v209
    %223 = vmatprep.subr.bf16.mxu0 0
    %224 = vmatpush1.bf16.msra.mxu0 %v208
    %225 = vmatprep.subr.bf16.mxu0 0
    %226 = vmatpush1.bf16.msra.mxu0 %v207
    %227 = vmatprep.subr.bf16.mxu0 0
    %228 = vmatpush1.bf16.msra.mxu0 %v206
    %229 = vmatprep.subr.bf16.mxu0 0
    %230 = vmatpush1.bf16.msra.mxu0 %v205
    %231 = vmatprep.subr.bf16.mxu0 0
    %232 = vmatpush1.bf16.msra.mxu0 %v204
    %233 = vmatprep.subr.bf16.mxu0 0
    %234 = vmatpush1.bf16.msra.mxu0 %v203
    %235 = vmatprep.subr.bf16.mxu0 0
    %236 = vmatpush2.bf16.msra.mxu0 0
    %237 = vmatprep.subr.bf16.mxu0 0
    %238 = vmatpush2.bf16.msra.mxu0 0
    %239 = vmatprep.subr.bf16.mxu0 0
    %240 = vmatpush2.bf16.msra.mxu0 0
    %241 = vmatprep.subr.bf16.mxu0 0
    %242 = vmatpush2.bf16.msra.mxu0 0
    %243 = vmatprep.subr.bf16.mxu0 0
    %244 = vmatpush2.bf16.msra.mxu0 0
    %245 = vmatprep.subr.bf16.mxu0 0
    %246 = vmatpush2.bf16.msra.mxu0 0
    %247 = vmatprep.subr.bf16.mxu0 0
    %248 = vmatpush2.bf16.msra.mxu0 0
    %249 = vmatprep.subr.bf16.mxu0 0
    %250 = vmatpush2.bf16.msra.mxu0 0
    %251 = vmatprep.mubr.bf16.mxu0 0
    %252 = vmatmul.mubr.bf16.gmra.mxu0 %v147
    %v253 = vpop.f32.mrf.mxu0
    %v254 = vadd.f32 %v169, %v253
    %v255 = vpop.f32.mrf.mxu0
    %v256 = vpop.f32.mrf.mxu0
    %v257 = vadd.f32 %v169, %v256
    %v258 = vpop.f32.mrf.mxu0
    %259 = vdwg.mxu0
    %v260 = vpack.c.bf16 %v257, %v254
    %v261 = vmax.bf16 %v260, 0
    %v262 = vld [vmem:[#allocation8] sm:$0xf]
    %v263 = vld [vmem:[#allocation8 + $0x4] sm:$0xf]
    %v264 = vld [vmem:[#allocation8 + $0x8] sm:$0xf]
    %v265 = vld [vmem:[#allocation8 + $0xc] sm:$0xf]
    %v266 = vld [vmem:[#allocation8 + $0x10] sm:$0xf]
    %v267 = vld [vmem:[#allocation8 + $0x14] sm:$0xf]
    %v268 = vld [vmem:[#allocation8 + $0x18] sm:$0xf]
    %v269 = vld [vmem:[#allocation8 + $0x1c] sm:$0xf]
    %v270 = vld [vmem:[#allocation8 + $0x20] sm:$0xf]
    %v271 = vld [vmem:[#allocation8 + $0x24] sm:$0xf]
    %v272 = vld [vmem:[#allocation8 + $0x28] sm:$0xf]
    %v273 = vld [vmem:[#allocation8 + $0x2c] sm:$0xf]
    %v274 = vld [vmem:[#allocation8 + $0x30] sm:$0xf]
    %v275 = vld [vmem:[#allocation8 + $0x34] sm:$0xf]
    %v276 = vld [vmem:[#allocation8 + $0x38] sm:$0xf]
    %v277 = vld [vmem:[#allocation8 + $0x3c] sm:$0xf]
    %v278 = vld [vmem:[%s6] sm:$0x1]
    %v280 = vlaneseq
    %v281 = vshrl.u32 %v280, 7
    %v282 = vsub.s32 0, %v281
    %v283 = vrot.slane %v278, %v282
    %v301 = vunpack.c.l.b16 %v262
    %v302 = vunpack.c.l.b16 %v263
    %v303 = vunpack.c.l.b16 %v264
    %v304 = vunpack.c.l.b16 %v265
    %v305 = vunpack.c.l.b16 %v266
    %v306 = vunpack.c.l.b16 %v267
    %v307 = vunpack.c.l.b16 %v268
    %v308 = vunpack.c.l.b16 %v269
    %v309 = vunpack.c.l.b16 %v270
    %v310 = vunpack.c.l.b16 %v271
    %v311 = vunpack.c.l.b16 %v272
    %v312 = vunpack.c.l.b16 %v273
    %v313 = vunpack.c.l.b16 %v274
    %v314 = vunpack.c.l.b16 %v275
    %v315 = vunpack.c.l.b16 %v276
    %v316 = vunpack.c.l.b16 %v277
    %v317 = vpack.c.b16 %v302, %v301
    %v318 = vpack.c.b16 %v304, %v303
    %v319 = vpack.c.b16 %v306, %v305
    %v320 = vpack.c.b16 %v308, %v307
    %v321 = vpack.c.b16 %v310, %v309
    %v322 = vpack.c.b16 %v312, %v311
    %v323 = vpack.c.b16 %v314, %v313
    %v324 = vpack.c.b16 %v316, %v315
    %333 = vmatprep.subr.bf16.mxu0 0
    %334 = vmatpush1.bf16.msra.mxu0 %v324
    %335 = vmatprep.subr.bf16.mxu0 0
    %336 = vmatpush1.bf16.msra.mxu0 %v323
    %337 = vmatprep.subr.bf16.mxu0 0
    %338 = vmatpush1.bf16.msra.mxu0 %v322
    %339 = vmatprep.subr.bf16.mxu0 0
    %340 = vmatpush1.bf16.msra.mxu0 %v321
    %341 = vmatprep.subr.bf16.mxu0 0
    %342 = vmatpush1.bf16.msra.mxu0 %v320
    %343 = vmatprep.subr.bf16.mxu0 0
    %344 = vmatpush1.bf16.msra.mxu0 %v319
    %345 = vmatprep.subr.bf16.mxu0 0
    %346 = vmatpush1.bf16.msra.mxu0 %v318
    %347 = vmatprep.subr.bf16.mxu0 0
    %348 = vmatpush1.bf16.msra.mxu0 %v317
    %349 = vmatprep.subr.bf16.mxu0 0
    %350 = vmatpush2.bf16.msra.mxu0 0
    %351 = vmatprep.subr.bf16.mxu0 0
    %352 = vmatpush2.bf16.msra.mxu0 0
    %353 = vmatprep.subr.bf16.mxu0 0
    %354 = vmatpush2.bf16.msra.mxu0 0
    %355 = vmatprep.subr.bf16.mxu0 0
    %356 = vmatpush2.bf16.msra.mxu0 0
    %357 = vmatprep.subr.bf16.mxu0 0
    %358 = vmatpush2.bf16.msra.mxu0 0
    %359 = vmatprep.subr.bf16.mxu0 0
    %360 = vmatpush2.bf16.msra.mxu0 0
    %361 = vmatprep.subr.bf16.mxu0 0
    %362 = vmatpush2.bf16.msra.mxu0 0
    %363 = vmatprep.subr.bf16.mxu0 0
    %364 = vmatpush2.bf16.msra.mxu0 0
    %365 = vmatprep.mubr.bf16.mxu0 0
    %366 = vmatmul.mubr.bf16.gmra.mxu0 %v261
    %v367 = vpop.f32.mrf.mxu0
    %v368 = vadd.f32 %v283, %v367
    %v369 = vpop.f32.mrf.mxu0
    %v370 = vpop.f32.mrf.mxu0
    %v371 = vadd.f32 %v283, %v370
    %v372 = vpop.f32.mrf.mxu0
    %373 = vdwg.mxu0
    %v374 = vpack.c.bf16 %v371, %v368
    %v376 = vunpack.c.l.b16 %v374
    %v377 = vunpack.c.h.b16 %v374
    %v378 = vpack.c.b16 %v376, %v376
    %v379 = vpack.c.b16 %v377, %v377
    %382 = vst [vmem:[#allocation10] sm:$0xf] %v378
    %383 = vst [vmem:[#allocation10 + $0x4] sm:$0xf] %v379
    // Predicated region
    $region46: #{tpu_custom_call.1} parent=1 // pred_check
      _
    $region47: #{tpu_custom_call.1} parent=1 // pred_check_branch
      %385 = sbr.rel (0) target = $region49
    $region48: #{tpu_custom_call.1} parent=1 // pred_region
      %s387 = ssub.s32 128, 128
      %388 = vsyncadd [#allocation4], %s387
      %s389 = sshll.u32 [#allocation10], 4
      %s390 = int_to_ptr.vmem [resolvable:$true] %s389
      %395 = dma.vmem_to_hbm [thread:$0]  %s390, 128, %s7, [#allocation4], 64, 64, 4
    $region49: #{tpu_custom_call.1} parent=1 // pred_fallthru
      _
    // Predicated region
    $region50: #{tpu_custom_call.1} parent=1 // pred_check
      _
    $region51: #{tpu_custom_call.1} parent=1 // pred_check_branch
      %397 = sbr.rel (0) target = $region53
    $region52: #{tpu_custom_call.1} parent=1 // pred_region
      %398 = dma.done [#allocation4], 128
    $region53: #{tpu_custom_call.1} parent=1 // pred_fallthru
      _
    %399 = vsyncpa [#allocation3], 1
    %400 = vsyncpa [#allocation6], 1
    %401 = vsyncpa [#allocation9], 1
    %402 = vsyncpa [#allocation4], 1

</llo_original>
